<compile_context>
chip_gen: v6e
topology: v6e:2x2x1
jax: 0.10.0
libtpu: 0.0.40
codegen_flags: <defaults>
</compile_context>

<pallas_src>
import functools

import jax
import jax.numpy as jnp
from jax.experimental import pallas as pl
from jax.experimental.pallas import tpu as pltpu


# ---------------- Pallas kernels (hot path) ----------------

def _conv_pool_relu_kernel(lhs_ref, w_ref, b_ref, o_ref, acc_ref, *, relu):
    # lhs_ref: (1, 4, TM, Kp) bf16  tap-stacked im2col rows, one plane per 2x2-pool corner
    # w_ref  : (Kp, OCp)      bf16  weights in (kh, kw, c) row order, K/OC zero-padded
    # b_ref  : (1, OCp)       f32
    # o_ref  : (1, TM, OCp)   bf16  pooled output rows t = p*PW + q
    # acc_ref: (TM, OCp)      f32   VMEM scratch (running max over the 4 pool corners)
    w = w_ref[...]                                       # loaded once, reused for 4 matmuls
    acc_ref[...] = jnp.dot(lhs_ref[0, 0], w, preferred_element_type=jnp.float32)
    for corner in range(1, 4):                           # static unroll: 3 more MXU matmuls
        acc_ref[...] = jnp.maximum(
            acc_ref[...],
            jnp.dot(lhs_ref[0, corner], w, preferred_element_type=jnp.float32))
    y = acc_ref[...] + b_ref[...]
    if relu:
        y = jnp.maximum(y, 0.0)
    o_ref[0] = y.astype(o_ref.dtype)


def _conv_relu_kernel(lhs_ref, w_ref, b_ref, o_ref, *, relu):
    # pool=False path: a single im2col GEMM (+ bias, optional ReLU).
    # lhs_ref: (1, TM, Kp) bf16, o_ref: (1, TM, OCp) bf16
    y = jnp.dot(lhs_ref[0], w_ref[...], preferred_element_type=jnp.float32) + b_ref[...]
    if relu:
        y = jnp.maximum(y, 0.0)
    o_ref[0] = y.astype(o_ref.dtype)


# ---------------- wrapper (layout glue + pallas_call setup) ----------------

def _round_up(a, b):
    return pl.cdiv(a, b) * b


def conv_block_forward(x_nchw, w_oihw, bias, *, stride=1, padding=0,
                       pool=True, relu=True):
    N, C, H, W = x_nchw.shape
    OC, IC, KH, KW = w_oihw.shape
    assert IC == C
    # TODO(synk): general stride would need a strided im2col; module default is stride=1.
    assert stride == 1, "only stride=1 is implemented"

    # Cheap XLA glue: NCHW -> NHWC, zero-pad, bf16 cast.
    x = jnp.transpose(x_nchw, (0, 2, 3, 1)).astype(jnp.bfloat16)
    if padding:
        x = jnp.pad(x, ((0, 0), (padding, padding), (padding, padding), (0, 0)))
    Hp, Wp = x.shape[1], x.shape[2]
    OH, OW = Hp - KH + 1, Wp - KW + 1
    assert OH >= 1 and OW >= 1

    # Lane-dense GEMM shapes: contraction K and output OC both padded to multiples of 128.
    K = KH * KW * C
    Kp = _round_up(K, 128)
    OCp = _round_up(OC, 128)

    # Tap-stacked im2col: patches[n, oh, ow, (i*KW + j)*C + c] = x[n, oh+i, ow+j, c].
    taps = [x[:, i:i + OH, j:j + OW, :] for i in range(KH) for j in range(KW)]
    patches = jnp.concatenate(taps, axis=-1)                       # (N, OH, OW, K) bf16
    patches = jnp.pad(patches, ((0, 0), (0, 0), (0, 0), (0, Kp - K)))

    # Weights: (OC, C, KH, KW) -> (KH, KW, C, OC) -> (K, OC), pad to (Kp, OCp).
    w_mat = jnp.transpose(w_oihw, (2, 3, 1, 0)).reshape(K, OC)
    w_mat = jnp.pad(w_mat, ((0, Kp - K), (0, OCp - OC))).astype(jnp.bfloat16)
    bias_p = jnp.pad(bias.astype(jnp.float32).reshape(1, OC), ((0, 0), (0, OCp - OC)))

    if pool:
        assert OH >= 2 and OW >= 2, "2x2 max-pool needs OH, OW >= 2"
        PH, PW = OH // 2, OW // 2
        M = PH * PW

        # One im2col plane per pool corner: lhs[n, 2*dr+dc, p*PW+q, :] = patches[n, 2p+dr, 2q+dc, :]
        corners = [patches[:, dr:dr + 2 * PH:2, dc:dc + 2 * PW:2, :]
                   for dr in range(2) for dc in range(2)]
        lhs = jnp.stack(corners, axis=1).reshape(N, 4, M, Kp)

        # Tile pooled rows; TM kept <= 512 so per-step VMEM stays ~1 MiB-scale even for
        # large images (v7x budget) while M-tiles add grid steps for TC parallelism.
        TM = min(512, _round_up(M, 16))
        Mp = _round_up(M, TM)
        lhs = jnp.pad(lhs, ((0, 0), (0, 0), (0, Mp - M), (0, 0)))

        kernel = functools.partial(_conv_pool_relu_kernel, relu=relu)
        out = pl.pallas_call(
            kernel,
            out_shape=jax.ShapeDtypeStruct((N, Mp, OCp), jnp.bfloat16),
            grid=(N, Mp // TM),
            in_specs=[
                pl.BlockSpec((1, 4, TM, Kp), lambda n, m: (n, 0, m, 0)),
                pl.BlockSpec((Kp, OCp), lambda n, m: (0, 0)),
                pl.BlockSpec((1, OCp), lambda n, m: (0, 0)),
            ],
            out_specs=pl.BlockSpec((1, TM, OCp), lambda n, m: (n, m, 0)),
            scratch_shapes=[pltpu.VMEM((TM, OCp), jnp.float32)],
            compiler_params=pltpu.CompilerParams(
                dimension_semantics=("parallel", "parallel")),
        )(lhs, w_mat, bias_p)
        out_nhwc = out[:, :M, :OC].reshape(N, PH, PW, OC)
    else:
        M = OH * OW
        lhs = patches.reshape(N, M, Kp)
        TM = min(512, _round_up(M, 16))
        Mp = _round_up(M, TM)
        lhs = jnp.pad(lhs, ((0, 0), (0, Mp - M), (0, 0)))

        kernel = functools.partial(_conv_relu_kernel, relu=relu)
        out = pl.pallas_call(
            kernel,
            out_shape=jax.ShapeDtypeStruct((N, Mp, OCp), jnp.bfloat16),
            grid=(N, Mp // TM),
            in_specs=[
                pl.BlockSpec((1, TM, Kp), lambda n, m: (n, m, 0)),
                pl.BlockSpec((Kp, OCp), lambda n, m: (0, 0)),
                pl.BlockSpec((1, OCp), lambda n, m: (0, 0)),
            ],
            out_specs=pl.BlockSpec((1, TM, OCp), lambda n, m: (n, m, 0)),
            compiler_params=pltpu.CompilerParams(
                dimension_semantics=("parallel", "parallel")),
        )(lhs, w_mat, bias_p)
        out_nhwc = out[:, :M, :OC].reshape(N, OH, OW, OC)

    # TODO(synk): BatchNorm2d (bn=True option of the module) is not implemented here.
    # NHWC -> NCHW (PyTorch output convention); cast back to f32 on the small sliced output.
    return jnp.transpose(out_nhwc.astype(jnp.float32), (0, 3, 1, 2))


# ---------------- reference (pure JAX) for sanity check ----------------

def reference_forward(x_nchw, w_oihw, bias, *, pool=True, relu=True):
    y = jax.lax.conv_general_dilated(
        x_nchw, w_oihw, window_strides=(1, 1), padding='VALID',
        dimension_numbers=('NCHW', 'OIHW', 'NCHW'),
        precision=jax.lax.Precision.HIGHEST)
    y = y + bias[None, :, None, None]
    if pool:
        y = jax.lax.reduce_window(y, -jnp.inf, jax.lax.max,
                                  window_dimensions=(1, 1, 2, 2),
                                  window_strides=(1, 1, 2, 2),
                                  padding='VALID')
    if relu:
        y = jnp.maximum(y, 0.0)
    return y


if __name__ == "__main__":
    # Module config: Conv(in_channels=4, out_channels=8) with defaults
    # (kernel_size=3, stride=1, padding=0, pool=True, relu=True, bn=False).
    N, CIN, H, W = 2, 4, 16, 16
    COUT, KH, KW = 8, 3, 3

    key = jax.random.PRNGKey(0)
    kx, kw, kb = jax.random.split(key, 3)
    x = jax.random.normal(kx, (N, CIN, H, W), dtype=jnp.float32)

    # Deterministic PyTorch-style init (kaiming-uniform-ish bounds).
    fan_in = CIN * KH * KW
    bound = 1.0 / (fan_in ** 0.5)
    weight = jax.random.uniform(kw, (COUT, CIN, KH, KW), jnp.float32, -bound, bound)
    bias = jax.random.uniform(kb, (COUT,), jnp.float32, -bound, bound)

    out = conv_block_forward(x, weight, bias, stride=1, padding=0,
                             pool=True, relu=True)
    out = jax.block_until_ready(out)

    # The kernel computes in bf16 with f32 accumulation and writes a bf16 result;
    # compare against a reference fed the same bf16-rounded inputs, with tolerances
    # that cover the final bf16 output rounding.
    xb = x.astype(jnp.bfloat16).astype(jnp.float32)
    wb = weight.astype(jnp.bfloat16).astype(jnp.float32)
    ref = jax.block_until_ready(reference_forward(xb, wb, bias, pool=True, relu=True))

    assert out.shape == ref.shape == (N, COUT, (H - KH + 1) // 2, (W - KW + 1) // 2)
    assert jnp.allclose(out, ref, atol=3e-2, rtol=3e-2), (
        "mismatch vs reference: max abs err "
        f"{float(jnp.max(jnp.abs(out - ref)))}")

    print("KERNEL_OK")
</pallas_src>

<mosaic_0001>
module attributes {stable_mosaic.version = 11 : i64} {
  func.func @_conv_pool_relu_kernel(%arg0: i32, %arg1: i32, %arg2: memref<1x4x64x128xbf16, #tpu.memory_space<vmem>>, %arg3: memref<128x128xbf16, #tpu.memory_space<vmem>>, %arg4: memref<1x128xf32, #tpu.memory_space<vmem>>, %arg5: memref<1x64x128xbf16, #tpu.memory_space<vmem>>, %arg6: memref<64x128xf32, #tpu.memory_space<vmem>>) attributes {dimension_semantics = [#tpu.dimension_semantics<parallel>, #tpu.dimension_semantics<parallel>], iteration_bounds = array<i64: 2, 1>, scalar_prefetch = 0 : i64, scratch_operands = 1 : i64, tpu.core_type = #tpu.core_type<tc>, window_params = [{transform_indices = @transform_0, window_bounds = array<i64: 1, 4, 64, 128>}, {pipeline_mode = #tpu.pipeline_mode<synchronous>, transform_indices = @transform_1, window_bounds = array<i64: 128, 128>}, {pipeline_mode = #tpu.pipeline_mode<synchronous>, transform_indices = @transform_2, window_bounds = array<i64: 1, 128>}, {transform_indices = @transform_3, window_bounds = array<i64: 1, 64, 128>}]} {
    %c0 = arith.constant 0 : index
    %c0_0 = arith.constant 0 : index
    %0 = vector.load %arg3[%c0, %c0_0] : memref<128x128xbf16, #tpu.memory_space<vmem>>, vector<128x128xbf16>
    %c0_1 = arith.constant 0 : index
    %c0_2 = arith.constant 0 : index
    %c0_3 = arith.constant 0 : index
    %c0_4 = arith.constant 0 : index
    %1 = vector.load %arg2[%c0_1, %c0_2, %c0_3, %c0_4] : memref<1x4x64x128xbf16, #tpu.memory_space<vmem>>, vector<1x1x64x128xbf16>
    %2 = vector.shape_cast %1 : vector<1x1x64x128xbf16> to vector<64x128xbf16>
    %cst = arith.constant dense<0.000000e+00> : vector<64x128xf32>
    %3 = tpu.matmul %2, %0, %cst {dimension_numbers = #tpu.dot_dimension_numbers<[1], [0], [0], [1], [0, 0, 1, 1], [], []>} : vector<64x128xbf16>, vector<128x128xbf16>, vector<64x128xf32> -> vector<64x128xf32>
    %c0_5 = arith.constant 0 : index
    %c0_6 = arith.constant 0 : index
    %4 = vector.load %arg6[%c0_5, %c0_6] : memref<64x128xf32, #tpu.memory_space<vmem>>, vector<64x128xf32>
    tpu.vector_store %arg6[%c0_5, %c0_6], %3 {strides = array<i32>} : memref<64x128xf32, #tpu.memory_space<vmem>>, vector<64x128xf32>,
    %c0_7 = arith.constant 0 : index
    %c0_8 = arith.constant 0 : index
    %5 = vector.load %arg6[%c0_7, %c0_8] : memref<64x128xf32, #tpu.memory_space<vmem>>, vector<64x128xf32>
    %c0_9 = arith.constant 0 : index
    %c1 = arith.constant 1 : index
    %c0_10 = arith.constant 0 : index
    %c0_11 = arith.constant 0 : index
    %6 = vector.load %arg2[%c0_9, %c1, %c0_10, %c0_11] : memref<1x4x64x128xbf16, #tpu.memory_space<vmem>>, vector<1x1x64x128xbf16>
    %7 = vector.shape_cast %6 : vector<1x1x64x128xbf16> to vector<64x128xbf16>
    %cst_12 = arith.constant dense<0.000000e+00> : vector<64x128xf32>
    %8 = tpu.matmul %7, %0, %cst_12 {dimension_numbers = #tpu.dot_dimension_numbers<[1], [0], [0], [1], [0, 0, 1, 1], [], []>} : vector<64x128xbf16>, vector<128x128xbf16>, vector<64x128xf32> -> vector<64x128xf32>
    %9 = arith.maximumf %5, %8 : vector<64x128xf32>
    %c0_13 = arith.constant 0 : index
    %c0_14 = arith.constant 0 : index
    %10 = vector.load %arg6[%c0_13, %c0_14] : memref<64x128xf32, #tpu.memory_space<vmem>>, vector<64x128xf32>
    tpu.vector_store %arg6[%c0_13, %c0_14], %9 {strides = array<i32>} : memref<64x128xf32, #tpu.memory_space<vmem>>, vector<64x128xf32>,
    %c0_15 = arith.constant 0 : index
    %c0_16 = arith.constant 0 : index
    %11 = vector.load %arg6[%c0_15, %c0_16] : memref<64x128xf32, #tpu.memory_space<vmem>>, vector<64x128xf32>
    %c0_17 = arith.constant 0 : index
    %c2 = arith.constant 2 : index
    %c0_18 = arith.constant 0 : index
    %c0_19 = arith.constant 0 : index
    %12 = vector.load %arg2[%c0_17, %c2, %c0_18, %c0_19] : memref<1x4x64x128xbf16, #tpu.memory_space<vmem>>, vector<1x1x64x128xbf16>
    %13 = vector.shape_cast %12 : vector<1x1x64x128xbf16> to vector<64x128xbf16>
    %cst_20 = arith.constant dense<0.000000e+00> : vector<64x128xf32>
    %14 = tpu.matmul %13, %0, %cst_20 {dimension_numbers = #tpu.dot_dimension_numbers<[1], [0], [0], [1], [0, 0, 1, 1], [], []>} : vector<64x128xbf16>, vector<128x128xbf16>, vector<64x128xf32> -> vector<64x128xf32>
    %15 = arith.maximumf %11, %14 : vector<64x128xf32>
    %c0_21 = arith.constant 0 : index
    %c0_22 = arith.constant 0 : index
    %16 = vector.load %arg6[%c0_21, %c0_22] : memref<64x128xf32, #tpu.memory_space<vmem>>, vector<64x128xf32>
    tpu.vector_store %arg6[%c0_21, %c0_22], %15 {strides = array<i32>} : memref<64x128xf32, #tpu.memory_space<vmem>>, vector<64x128xf32>,
    %c0_23 = arith.constant 0 : index
    %c0_24 = arith.constant 0 : index
    %17 = vector.load %arg6[%c0_23, %c0_24] : memref<64x128xf32, #tpu.memory_space<vmem>>, vector<64x128xf32>
    %c0_25 = arith.constant 0 : index
    %c3 = arith.constant 3 : index
    %c0_26 = arith.constant 0 : index
    %c0_27 = arith.constant 0 : index
    %18 = vector.load %arg2[%c0_25, %c3, %c0_26, %c0_27] : memref<1x4x64x128xbf16, #tpu.memory_space<vmem>>, vector<1x1x64x128xbf16>
    %19 = vector.shape_cast %18 : vector<1x1x64x128xbf16> to vector<64x128xbf16>
    %cst_28 = arith.constant dense<0.000000e+00> : vector<64x128xf32>
    %20 = tpu.matmul %19, %0, %cst_28 {dimension_numbers = #tpu.dot_dimension_numbers<[1], [0], [0], [1], [0, 0, 1, 1], [], []>} : vector<64x128xbf16>, vector<128x128xbf16>, vector<64x128xf32> -> vector<64x128xf32>
    %21 = arith.maximumf %17, %20 : vector<64x128xf32>
    %c0_29 = arith.constant 0 : index
    %c0_30 = arith.constant 0 : index
    %22 = vector.load %arg6[%c0_29, %c0_30] : memref<64x128xf32, #tpu.memory_space<vmem>>, vector<64x128xf32>
    tpu.vector_store %arg6[%c0_29, %c0_30], %21 {strides = array<i32>} : memref<64x128xf32, #tpu.memory_space<vmem>>, vector<64x128xf32>,
    %c0_31 = arith.constant 0 : index
    %c0_32 = arith.constant 0 : index
    %23 = vector.load %arg6[%c0_31, %c0_32] : memref<64x128xf32, #tpu.memory_space<vmem>>, vector<64x128xf32>
    %c0_33 = arith.constant 0 : index
    %c0_34 = arith.constant 0 : index
    %24 = vector.load %arg4[%c0_33, %c0_34] : memref<1x128xf32, #tpu.memory_space<vmem>>, vector<1x128xf32>
    %25 = vector.broadcast %24 : vector<1x128xf32> to vector<64x128xf32>
    %26 = arith.addf %23, %25 : vector<64x128xf32>
    %cst_35 = arith.constant 0.000000e+00 : f32
    %27 = vector.broadcast %cst_35 : f32 to vector<64x128xf32>
    %28 = arith.maximumf %26, %27 : vector<64x128xf32>
    %29 = arith.truncf %28 : vector<64x128xf32> to vector<64x128xbf16>
    %c0_36 = arith.constant 0 : index
    %c0_37 = arith.constant 0 : index
    %c0_38 = arith.constant 0 : index
    %30 = vector.load %arg5[%c0_36, %c0_37, %c0_38] : memref<1x64x128xbf16, #tpu.memory_space<vmem>>, vector<1x64x128xbf16>
    %31 = vector.shape_cast %30 : vector<1x64x128xbf16> to vector<64x128xbf16>
    %32 = vector.shape_cast %29 : vector<64x128xbf16> to vector<1x64x128xbf16>
    tpu.vector_store %arg5[%c0_36, %c0_37, %c0_38], %32 {strides = array<i32>} : memref<1x64x128xbf16, #tpu.memory_space<vmem>>, vector<1x64x128xbf16>,
    return
  }
  func.func @transform_0(%arg0: i32, %arg1: i32) -> (i32, i32, i32, i32) {
    %c0_i32 = arith.constant 0 : i32
    %c0_i32_0 = arith.constant 0 : i32
    %c0_i32_1 = arith.constant 0 : i32
    return %arg0, %c0_i32, %arg1, %c0_i32_0 : i32, i32, i32, i32
  }
  func.func @transform_1(%arg0: i32, %arg1: i32) -> (i32, i32) {
    %c0_i32 = arith.constant 0 : i32
    %c0_i32_0 = arith.constant 0 : i32
    %c0_i32_1 = arith.constant 0 : i32
    return %c0_i32, %c0_i32_0 : i32, i32
  }
  func.func @transform_2(%arg0: i32, %arg1: i32) -> (i32, i32) {
    %c0_i32 = arith.constant 0 : i32
    %c0_i32_0 = arith.constant 0 : i32
    %c0_i32_1 = arith.constant 0 : i32
    return %c0_i32, %c0_i32_0 : i32, i32
  }
  func.func @transform_3(%arg0: i32, %arg1: i32) -> (i32, i32, i32) {
    %c0_i32 = arith.constant 0 : i32
    %c0_i32_0 = arith.constant 0 : i32
    return %arg0, %arg1, %c0_i32 : i32, i32, i32
  }
}

</mosaic_0001>

<llo_original>
// kernel: tpu_custom_call.1
$region0: #{tpu_custom_call.1}
  #allocation0 [shape = 'u32[]', space=smem, size = 0x4, offset = 0x4, fixed_abs, tag = 'smem constant byte address 0x4 - core index']
  #allocation1 [shape = 'u32[144,128]{1,0:T(1,128)}', space=vmem, size = 0x12000, scoped, tag = 'internal scratch']
  #allocation2 [shape = 'f32[64,128]{1,0:T(8,128)}', space=vmem, size = 0x8000, scoped, tag = 'scratch operand']
  %s0 = inlined_call_operand.hbm [shape: bf16[2,4,64,128], index: 0, kind: input, shape index: {}]
  %s1 = inlined_call_operand.hbm [shape: bf16[128,128], index: 1, kind: input, shape index: {}]
  %s2 = inlined_call_operand.vmem [shape: f32[1,128], index: 2, kind: input, shape index: {}]
  %s3 = inlined_call_operand.hbm [shape: bf16[2,64,128], index: 3, kind: output, shape index: {}]
  %s4 = sld [smem:[#allocation0]]
  $region53: #{tpu_custom_call.1} parent=0
    _
  %s6 = ssub.s32 1, %s4
  %s7 = scalar_select 0, %s6, %s4
  $region1: #{tpu_custom_call.1} parent=0
    #allocation3 [shape = 'u8[131072]{0}', space=vmem, size = 0x20000, scoped, tag = 'input window, operand 0']
    #allocation4 [shape = 's32[2]{0}', space=sflag, size = 0x8, scoped, tag = 'scoped memory for tpu_custom_call.1']
    #allocation5 [shape = 's32[2]{0}', space=sflag, size = 0x8, scoped, tag = 'scoped memory for tpu_custom_call.1']
    #allocation6 [shape = 'u8[32768]{0}', space=vmem, size = 0x8000, scoped, tag = 'input window, operand 1, single buffered']
    #allocation7 [shape = 's32[1]{0}', space=sflag, size = 0x4, scoped, tag = 'scoped memory for tpu_custom_call.1']
    #allocation8 [shape = 'u8[32768]{0}', space=vmem, size = 0x8000, scoped, tag = 'output window, operand 0']
    %8 = vsyncpa [#allocation4], 0
    %s9 = scalar_lea.sflag [#allocation4], 1
    %10 = vsyncpa %s9, 0
    %11 = vsyncpa [#allocation7], 0
    %12 = vsyncpa [#allocation5], 0
    %s13 = scalar_lea.sflag [#allocation5], 1
    %14 = vsyncpa %s13, 0
    loop: start=0, step=1, limit=4
    $region2: #{tpu_custom_call.1} parent=1 // loop_pre_header
      _
    $region3: #{tpu_custom_call.1} parent=1 // loop_header
      %s16 = sphi 0, %s20
      %p17 = scmp.ge.s32.totalorder %s16, 4
      %s23 = sphi 0, %s35
      %s24 = sphi 0, %s31
      %s25 = sphi 0, %s23
      %s26 = sphi 0, %s24
      %s27 = sphi 0, %s25
      %s28 = sphi 0, %s26
      %s40 = sphi 0, %s42
      %s43 = sphi 0, %s40
      %s44 = sphi 0, %s43
      %s60 = sphi 0, %s44
      %s64 = sphi 0, %s64
      %s66 = sphi 0, %s64
      %s67 = sphi 0, %s66
      %s81 = sphi 0, %s67
      %s85 = sphi 0, %s85
      %s87 = sphi 0, %s85
      %s88 = sphi 0, %s87
      %s102 = sphi 0, %s88
      %s110 = sphi 0, %s112
      %s113 = sphi 0, %s110
      %s114 = sphi 0, %s113
      %s130 = sphi 0, %s114
    $region4: #{tpu_custom_call.1} parent=1 // loop_header_branch
      %19 = sbr.rel (%p17) target = $region8
    $region5: #{tpu_custom_call.1} parent=1 // loop_body
      %s21 = ssub.s32 %s16, 1
      %s22 = ssub.s32 %s16, 2
      %s29 = sadd.s32 1, %s24
      %p30 = scmp.ge.s32.totalorder %s29, 1
      %s31 = scalar_select %p30, 0, %s29
      %s32 = sadd.s32 1, %s23
      %s33 = scalar_select %p30, %s32, %s23
      %p34 = scmp.ge.s32.totalorder %s33, 2
      %s35 = scalar_select %p34, 0, %s33
      %s36 = ssub.s32 %s23, %s35
      %s37 = ssub.s32 %s24, %s31
      %s38 = sor.u32 %s36, %s37
      %p39 = scmp.eq.s32.totalorder %s38, 0
      %s41 = sadd.s32 %s40, 1
      %s42 = scalar_select %p39, %s40, %s41
      %p45 = pneg %p39
      %p46 = scmp.eq.s32.totalorder %s16, 1
      %p47 = por %p45, %p46
      %p48 = scmp.ne.s32.totalorder %s40, %s43
      %p49 = scmp.eq.s32.totalorder %s16, 0
      %p50 = por %p48, %p49
      %p51 = scmp.ne.s32.totalorder %s40, %s43
      %p52 = scmp.eq.s32.totalorder %s21, 1
      %p53 = por %p51, %p52
      %p54 = scmp.ne.s32.totalorder %s43, %s44
      %p55 = scmp.eq.s32.totalorder %s21, 0
      %p56 = por %p54, %p55
      %p57 = scmp.ne.s32.totalorder %s43, %s44
      %p58 = scmp.eq.s32.totalorder %s22, 1
      %p59 = por %p57, %p58
      %p61 = scmp.ne.s32.totalorder %s44, %s60
      %p62 = scmp.eq.s32.totalorder %s22, 0
      %p63 = por %p61, %p62
      %s65 = sadd.s32 %s64, 1
      %p68 = scmp.eq.s32.totalorder %s16, 1
      %p69 = scmp.ne.s32.totalorder %s64, %s66
      %p70 = scmp.eq.s32.totalorder %s16, 0
      %p71 = por %p69, %p70
      %p72 = scmp.ne.s32.totalorder %s64, %s66
      %p73 = scmp.eq.s32.totalorder %s21, 1
      %p74 = por %p72, %p73
      %p75 = scmp.ne.s32.totalorder %s66, %s67
      %p76 = scmp.eq.s32.totalorder %s21, 0
      %p77 = por %p75, %p76
      %p78 = scmp.ne.s32.totalorder %s66, %s67
      %p79 = scmp.eq.s32.totalorder %s22, 1
      %p80 = por %p78, %p79
      %p82 = scmp.ne.s32.totalorder %s67, %s81
      %p83 = scmp.eq.s32.totalorder %s22, 0
      %p84 = por %p82, %p83
      %s86 = sadd.s32 %s85, 1
      %p89 = scmp.eq.s32.totalorder %s16, 1
      %p90 = scmp.ne.s32.totalorder %s85, %s87
      %p91 = scmp.eq.s32.totalorder %s16, 0
      %p92 = por %p90, %p91
      %p93 = scmp.ne.s32.totalorder %s85, %s87
      %p94 = scmp.eq.s32.totalorder %s21, 1
      %p95 = por %p93, %p94
      %p96 = scmp.ne.s32.totalorder %s87, %s88
      %p97 = scmp.eq.s32.totalorder %s21, 0
      %p98 = por %p96, %p97
      %p99 = scmp.ne.s32.totalorder %s87, %s88
      %p100 = scmp.eq.s32.totalorder %s22, 1
      %p101 = por %p99, %p100
      %p103 = scmp.ne.s32.totalorder %s88, %s102
      %p104 = scmp.eq.s32.totalorder %s22, 0
      %p105 = por %p103, %p104
      %s106 = ssub.s32 %s23, %s35
      %s107 = ssub.s32 %s24, %s31
      %s108 = sor.u32 %s106, %s107
      %p109 = scmp.eq.s32.totalorder %s108, 0
      %s111 = sadd.s32 %s110, 1
      %s112 = scalar_select %p109, %s110, %s111
      %p115 = pneg %p109
      %p116 = scmp.eq.s32.totalorder %s16, 1
      %p117 = por %p115, %p116
      %p118 = scmp.ne.s32.totalorder %s110, %s113
      %p119 = scmp.eq.s32.totalorder %s16, 0
      %p120 = por %p118, %p119
      %p121 = scmp.ne.s32.totalorder %s110, %s113
      %p122 = scmp.eq.s32.totalorder %s21, 1
      %p123 = por %p121, %p122
      %p124 = scmp.ne.s32.totalorder %s113, %s114
      %p125 = scmp.eq.s32.totalorder %s21, 0
      %p126 = por %p124, %p125
      %p127 = scmp.ne.s32.totalorder %s113, %s114
      %p128 = scmp.eq.s32.totalorder %s22, 1
      %p129 = por %p127, %p128
      %p131 = scmp.ne.s32.totalorder %s114, %s130
      %p132 = scmp.eq.s32.totalorder %s22, 0
      %p133 = por %p131, %p132
      %p134 = scmp.le.s32.totalorder 1, %s16
      %p135 = scmp.lt.s32.totalorder %s16, 3
      %p136 = pnand %p134, %p135
      %p137 = pneg %p136
      // Predicated region
      $region9: #{tpu_custom_call.1} parent=5 // pred_check
        _
      $region10: #{tpu_custom_call.1} parent=5 // pred_check_branch
        %139 = sbr.rel (%p136) target = $region12
      $region11: #{tpu_custom_call.1} parent=5 // pred_region
        %s140 = ssub.s32 %s16, 1
        // Predicated region
        $region13: #{tpu_custom_call.1} parent=11 // pred_check
          %p141 = pneg %p77
        $region14: #{tpu_custom_call.1} parent=11 // pred_check_branch
          %143 = sbr.rel (%p141) target = $region16
        $region15: #{tpu_custom_call.1} parent=11 // pred_region
          %s145 = ssub.s32 1024, 1024
          %146 = vsyncadd [#allocation7], %s145
          %s147 = sshll.u32 [#allocation6], 4
          %s148 = int_to_ptr.vmem [resolvable:$true] %s147
          %153 = dma.hbm_to_vmem [thread:$0]  %s1, 1024, %s148, [#allocation7], 64, 64, 4
        $region16: #{tpu_custom_call.1} parent=11 // pred_fallthru
          _
        // Predicated region
        $region17: #{tpu_custom_call.1} parent=11 // pred_check
          %p154 = pneg %p98
        $region18: #{tpu_custom_call.1} parent=11 // pred_check_branch
          %156 = sbr.rel (%p154) target = $region20
        $region19: #{tpu_custom_call.1} parent=11 // pred_region
          _
        $region20: #{tpu_custom_call.1} parent=11 // pred_fallthru
          _
      $region12: #{tpu_custom_call.1} parent=5 // pred_fallthru
        _
      %p157 = scmp.lt.s32.totalorder %s16, 2
      // Predicated region
      $region21: #{tpu_custom_call.1} parent=5 // pred_check
        %p158 = pneg %p157
      $region22: #{tpu_custom_call.1} parent=5 // pred_check_branch
        %160 = sbr.rel (%p158) target = $region24
      $region23: #{tpu_custom_call.1} parent=5 // pred_region
        // Predicated region
        $region25: #{tpu_custom_call.1} parent=23 // pred_check
          %p161 = pneg %p50
        $region26: #{tpu_custom_call.1} parent=23 // pred_check_branch
          %163 = sbr.rel (%p161) target = $region28
        $region27: #{tpu_custom_call.1} parent=23 // pred_region
          %s164 = sand.u32 %s40, 1
          %s165 = scalar_lea.sflag [#allocation4], %s164
          %s166 = sand.u32 %s40, 1
          %s167 = smul.addr %s166, 128
          %s168 = scalar_lea.vmem [#allocation3], %s167
          %s169 = smul.u32 8, %s24
          %s171 = ssub.s32 2048, 2048
          %172 = vsyncadd %s165, %s171
          %s173 = smul.addr %s23, 32
          %s174 = sadd.s32 %s169, %s173
          %s175 = smul.addr %s174, 64
          %s176 = scalar_lea.hbm %s0, %s175
          %s177 = sshll.u32 %s168, 4
          %s178 = int_to_ptr.vmem [resolvable:$true] %s177
          %183 = dma.hbm_to_vmem [thread:$0]  %s176, 2048, %s178, %s165, 64, 64, 4
        $region28: #{tpu_custom_call.1} parent=23 // pred_fallthru
          _
      $region24: #{tpu_custom_call.1} parent=5 // pred_fallthru
        _
      %p184 = scmp.le.s32.totalorder 1, %s16
      %p185 = scmp.lt.s32.totalorder %s16, 3
      %p186 = pnand %p184, %p185
      %p187 = pneg %p186
      // Predicated region
      $region29: #{tpu_custom_call.1} parent=5 // pred_check
        _
      $region30: #{tpu_custom_call.1} parent=5 // pred_check_branch
        %189 = sbr.rel (%p186) target = $region32
      $region31: #{tpu_custom_call.1} parent=5 // pred_region
        %s190 = ssub.s32 %s16, 1
        %s191 = sand.u32 %s43, 1
        %s192 = scalar_lea.sflag [#allocation4], %s191
        %s193 = sand.u32 %s43, 1
        %s194 = smul.addr %s193, 128
        %s195 = scalar_lea.vmem [#allocation3], %s194
        // Predicated region
        $region33: #{tpu_custom_call.1} parent=31 // pred_check
          %p196 = pneg %p56
        $region34: #{tpu_custom_call.1} parent=31 // pred_check_branch
          %198 = sbr.rel (%p196) target = $region36
        $region35: #{tpu_custom_call.1} parent=31 // pred_region
          %199 = dma.done %s192, 2048
        $region36: #{tpu_custom_call.1} parent=31 // pred_fallthru
          _
        // Predicated region
        $region37: #{tpu_custom_call.1} parent=31 // pred_check
          %p200 = pneg %p77
        $region38: #{tpu_custom_call.1} parent=31 // pred_check_branch
          %202 = sbr.rel (%p200) target = $region40
        $region39: #{tpu_custom_call.1} parent=31 // pred_region
          %203 = dma.done [#allocation7], 1024
        $region40: #{tpu_custom_call.1} parent=31 // pred_fallthru
          _
        %s204 = sand.u32 %s43, 1
        %s205 = scalar_lea.sflag [#allocation4], %s204
        %s206 = sand.u32 %s43, 1
        %s207 = smul.addr %s206, 128
        %s208 = scalar_lea.vmem [#allocation3], %s207
        %p209 = pneg %p56
        %p210 = pneg %p53
        %p211 = pneg %p77
        %p212 = pneg %p74
        %p213 = pneg %p98
        %p214 = pneg %p95
        %p215 = pneg %p126
        %p216 = pneg %p123
        %s217 = sand.u32 %s113, 1
        %s218 = scalar_lea.sflag [#allocation5], %s217
        %s219 = sand.u32 %s113, 1
        %s220 = smul.addr %s219, 32
        %s221 = scalar_lea.vmem [#allocation8], %s220
        %s222 = smul.u32 8, %s26
        %s223 = smul.u32 8, %s26
        %v225 = vld [vmem:[#allocation6] sm:$0xf]
        %v226 = vld [vmem:[#allocation6 + $0x4] sm:$0xf]
        %v227 = vld [vmem:[#allocation6 + $0x8] sm:$0xf]
        %v228 = vld [vmem:[#allocation6 + $0xc] sm:$0xf]
        %v229 = vld [vmem:[#allocation6 + $0x10] sm:$0xf]
        %v230 = vld [vmem:[#allocation6 + $0x14] sm:$0xf]
        %v231 = vld [vmem:[#allocation6 + $0x18] sm:$0xf]
        %v232 = vld [vmem:[#allocation6 + $0x1c] sm:$0xf]
        %v233 = vld [vmem:[#allocation6 + $0x20] sm:$0xf]
        %v234 = vld [vmem:[#allocation6 + $0x24] sm:$0xf]
        %v235 = vld [vmem:[#allocation6 + $0x28] sm:$0xf]
        %v236 = vld [vmem:[#allocation6 + $0x2c] sm:$0xf]
        %v237 = vld [vmem:[#allocation6 + $0x30] sm:$0xf]
        %v238 = vld [vmem:[#allocation6 + $0x34] sm:$0xf]
        %v239 = vld [vmem:[#allocation6 + $0x38] sm:$0xf]
        %v240 = vld [vmem:[#allocation6 + $0x3c] sm:$0xf]
        %v241 = vld [vmem:[%s195] sm:$0xf]
        %v242 = vld [vmem:[%s195 + $0x4] sm:$0xf]
        %v243 = vld [vmem:[%s195 + $0x8] sm:$0xf]
        %v244 = vld [vmem:[%s195 + $0xc] sm:$0xf]
        %v245 = vld [vmem:[%s195 + $0x10] sm:$0xf]
        %v246 = vld [vmem:[%s195 + $0x14] sm:$0xf]
        %v247 = vld [vmem:[%s195 + $0x18] sm:$0xf]
        %v248 = vld [vmem:[%s195 + $0x1c] sm:$0xf]
        %v257 = vunpack.c.l.b16 %v241
        %v258 = vunpack.c.l.b16 %v242
        %v259 = vunpack.c.l.b16 %v243
        %v260 = vunpack.c.l.b16 %v244
        %v261 = vunpack.c.l.b16 %v245
        %v262 = vunpack.c.l.b16 %v246
        %v263 = vunpack.c.l.b16 %v247
        %v264 = vunpack.c.l.b16 %v248
        %v265 = vpack.c.b16 %v258, %v257
        %v266 = vpack.c.b16 %v260, %v259
        %v267 = vpack.c.b16 %v262, %v261
        %v268 = vpack.c.b16 %v264, %v263
        %v289 = vunpack.c.l.b16 %v225
        %v290 = vunpack.c.l.b16 %v226
        %v291 = vunpack.c.l.b16 %v227
        %v292 = vunpack.c.l.b16 %v228
        %v293 = vunpack.c.l.b16 %v229
        %v294 = vunpack.c.l.b16 %v230
        %v295 = vunpack.c.l.b16 %v231
        %v296 = vunpack.c.l.b16 %v232
        %v297 = vunpack.c.l.b16 %v233
        %v298 = vunpack.c.l.b16 %v234
        %v299 = vunpack.c.l.b16 %v235
        %v300 = vunpack.c.l.b16 %v236
        %v301 = vunpack.c.l.b16 %v237
        %v302 = vunpack.c.l.b16 %v238
        %v303 = vunpack.c.l.b16 %v239
        %v304 = vunpack.c.l.b16 %v240
        %v305 = vpack.c.b16 %v290, %v289
        %v306 = vpack.c.b16 %v292, %v291
        %v307 = vpack.c.b16 %v294, %v293
        %v308 = vpack.c.b16 %v296, %v295
        %v309 = vpack.c.b16 %v298, %v297
        %v310 = vpack.c.b16 %v300, %v299
        %v311 = vpack.c.b16 %v302, %v301
        %v312 = vpack.c.b16 %v304, %v303
        %321 = vmatprep.subr.bf16.mxu0 0
        %322 = vmatpush1.bf16.msra.mxu0 %v312
        %323 = vmatprep.subr.bf16.mxu0 0
        %324 = vmatpush1.bf16.msra.mxu0 %v311
        %325 = vmatprep.subr.bf16.mxu0 0
        %326 = vmatpush1.bf16.msra.mxu0 %v310
        %327 = vmatprep.subr.bf16.mxu0 0
        %328 = vmatpush1.bf16.msra.mxu0 %v309
        %329 = vmatprep.subr.bf16.mxu0 0
        %330 = vmatpush1.bf16.msra.mxu0 %v308
        %331 = vmatprep.subr.bf16.mxu0 0
        %332 = vmatpush1.bf16.msra.mxu0 %v307
        %333 = vmatprep.subr.bf16.mxu0 0
        %334 = vmatpush1.bf16.msra.mxu0 %v306
        %335 = vmatprep.subr.bf16.mxu0 0
        %336 = vmatpush1.bf16.msra.mxu0 %v305
        %337 = vmatprep.subr.bf16.mxu0 0
        %338 = vmatpush2.bf16.msra.mxu0 0
        %339 = vmatprep.subr.bf16.mxu0 0
        %340 = vmatpush2.bf16.msra.mxu0 0
        %341 = vmatprep.subr.bf16.mxu0 0
        %342 = vmatpush2.bf16.msra.mxu0 0
        %343 = vmatprep.subr.bf16.mxu0 0
        %344 = vmatpush2.bf16.msra.mxu0 0
        %345 = vmatprep.subr.bf16.mxu0 0
        %346 = vmatpush2.bf16.msra.mxu0 0
        %347 = vmatprep.subr.bf16.mxu0 0
        %348 = vmatpush2.bf16.msra.mxu0 0
        %349 = vmatprep.subr.bf16.mxu0 0
        %350 = vmatpush2.bf16.msra.mxu0 0
        %351 = vmatprep.subr.bf16.mxu0 0
        %352 = vmatpush2.bf16.msra.mxu0 0
        %353 = vmatprep.mubr.bf16.mxu0 0
        %354 = vmatmul.mubr.bf16.gmra.mxu0 %v265
        %v355 = vpop.f32.mrf.mxu0
        %v356 = vadd.f32 0.0, %v355
        %v357 = vpop.f32.mrf.mxu0
        %v358 = vpop.f32.mrf.mxu0
        %v359 = vadd.f32 0.0, %v358
        %v360 = vpop.f32.mrf.mxu0
        %361 = vmatprep.mubr.bf16.mxu0 0
        %362 = vmatmul.mubr.bf16.gmra.mxu0 %v266
        %v363 = vpop.f32.mrf.mxu0
        %v364 = vadd.f32 0.0, %v363
        %v365 = vpop.f32.mrf.mxu0
        %v366 = vpop.f32.mrf.mxu0
        %v367 = vadd.f32 0.0, %v366
        %v368 = vpop.f32.mrf.mxu0
        %369 = vmatprep.mubr.bf16.mxu0 0
        %370 = vmatmul.mubr.bf16.gmra.mxu0 %v267
        %v371 = vpop.f32.mrf.mxu0
        %v372 = vadd.f32 0.0, %v371
        %v373 = vpop.f32.mrf.mxu0
        %v374 = vpop.f32.mrf.mxu0
        %v375 = vadd.f32 0.0, %v374
        %v376 = vpop.f32.mrf.mxu0
        %377 = vmatprep.mubr.bf16.mxu0 0
        %378 = vmatmul.mubr.bf16.gmra.mxu0 %v268
        %v379 = vpop.f32.mrf.mxu0
        %v380 = vadd.f32 0.0, %v379
        %v381 = vpop.f32.mrf.mxu0
        %v382 = vpop.f32.mrf.mxu0
        %v383 = vadd.f32 0.0, %v382
        %v384 = vpop.f32.mrf.mxu0
        %385 = vdwg.mxu0
        %386 = vst [vmem:[#allocation2] sm:$0xff] %v356
        %387 = vst [vmem:[#allocation2 + $0x8] sm:$0xff] %v359
        %388 = vst [vmem:[#allocation2 + $0x10] sm:$0xff] %v364
        %389 = vst [vmem:[#allocation2 + $0x18] sm:$0xff] %v367
        %390 = vst [vmem:[#allocation2 + $0x20] sm:$0xff] %v372
        %391 = vst [vmem:[#allocation2 + $0x28] sm:$0xff] %v375
        %392 = vst [vmem:[#allocation2 + $0x30] sm:$0xff] %v380
        %393 = vst [vmem:[#allocation2 + $0x38] sm:$0xff] %v383
        %v394 = vld [vmem:[#allocation2] sm:$0xff]
        %v395 = vld [vmem:[#allocation2 + $0x8] sm:$0xff]
        %v396 = vld [vmem:[#allocation2 + $0x10] sm:$0xff]
        %v397 = vld [vmem:[#allocation2 + $0x18] sm:$0xff]
        %v398 = vld [vmem:[#allocation2 + $0x20] sm:$0xff]
        %v399 = vld [vmem:[#allocation2 + $0x28] sm:$0xff]
        %v400 = vld [vmem:[#allocation2 + $0x30] sm:$0xff]
        %v401 = vld [vmem:[#allocation2 + $0x38] sm:$0xff]
        %s402 = scalar_lea.vmem %s195, 32 [#allocation3]
        %v403 = vld [vmem:[%s402] sm:$0xf]
        %v404 = vld [vmem:[%s402 + $0x4] sm:$0xf]
        %v405 = vld [vmem:[%s402 + $0x8] sm:$0xf]
        %v406 = vld [vmem:[%s402 + $0xc] sm:$0xf]
        %v407 = vld [vmem:[%s402 + $0x10] sm:$0xf]
        %v408 = vld [vmem:[%s402 + $0x14] sm:$0xf]
        %v409 = vld [vmem:[%s402 + $0x18] sm:$0xf]
        %v410 = vld [vmem:[%s402 + $0x1c] sm:$0xf]
        %v419 = vunpack.c.l.b16 %v403
        %v420 = vunpack.c.l.b16 %v404
        %v421 = vunpack.c.l.b16 %v405
        %v422 = vunpack.c.l.b16 %v406
        %v423 = vunpack.c.l.b16 %v407
        %v424 = vunpack.c.l.b16 %v408
        %v425 = vunpack.c.l.b16 %v409
        %v426 = vunpack.c.l.b16 %v410
        %v427 = vpack.c.b16 %v420, %v419
        %v428 = vpack.c.b16 %v422, %v421
        %v429 = vpack.c.b16 %v424, %v423
        %v430 = vpack.c.b16 %v426, %v425
        %435 = vmatprep.subr.bf16.mxu0 0
        %436 = vmatpush1.bf16.msra.mxu0 %v312
        %437 = vmatprep.subr.bf16.mxu0 0
        %438 = vmatpush1.bf16.msra.mxu0 %v311
        %439 = vmatprep.subr.bf16.mxu0 0
        %440 = vmatpush1.bf16.msra.mxu0 %v310
        %441 = vmatprep.subr.bf16.mxu0 0
        %442 = vmatpush1.bf16.msra.mxu0 %v309
        %443 = vmatprep.subr.bf16.mxu0 0
        %444 = vmatpush1.bf16.msra.mxu0 %v308
        %445 = vmatprep.subr.bf16.mxu0 0
        %446 = vmatpush1.bf16.msra.mxu0 %v307
        %447 = vmatprep.subr.bf16.mxu0 0
        %448 = vmatpush1.bf16.msra.mxu0 %v306
        %449 = vmatprep.subr.bf16.mxu0 0
        %450 = vmatpush1.bf16.msra.mxu0 %v305
        %451 = vmatprep.subr.bf16.mxu0 0
        %452 = vmatpush2.bf16.msra.mxu0 0
        %453 = vmatprep.subr.bf16.mxu0 0
        %454 = vmatpush2.bf16.msra.mxu0 0
        %455 = vmatprep.subr.bf16.mxu0 0
        %456 = vmatpush2.bf16.msra.mxu0 0
        %457 = vmatprep.subr.bf16.mxu0 0
        %458 = vmatpush2.bf16.msra.mxu0 0
        %459 = vmatprep.subr.bf16.mxu0 0
        %460 = vmatpush2.bf16.msra.mxu0 0
        %461 = vmatprep.subr.bf16.mxu0 0
        %462 = vmatpush2.bf16.msra.mxu0 0
        %463 = vmatprep.subr.bf16.mxu0 0
        %464 = vmatpush2.bf16.msra.mxu0 0
        %465 = vmatprep.subr.bf16.mxu0 0
        %466 = vmatpush2.bf16.msra.mxu0 0
        %467 = vmatprep.mubr.bf16.mxu0 0
        %468 = vmatmul.mubr.bf16.gmra.mxu0 %v427
        %v469 = vpop.f32.mrf.mxu0
        %v470 = vadd.f32 0.0, %v469
        %v471 = vpop.f32.mrf.mxu0
        %v472 = vpop.f32.mrf.mxu0
        %v473 = vadd.f32 0.0, %v472
        %v474 = vpop.f32.mrf.mxu0
        %475 = vmatprep.mubr.bf16.mxu0 0
        %476 = vmatmul.mubr.bf16.gmra.mxu0 %v428
        %v477 = vpop.f32.mrf.mxu0
        %v478 = vadd.f32 0.0, %v477
        %v479 = vpop.f32.mrf.mxu0
        %v480 = vpop.f32.mrf.mxu0
        %v481 = vadd.f32 0.0, %v480
        %v482 = vpop.f32.mrf.mxu0
        %483 = vmatprep.mubr.bf16.mxu0 0
        %484 = vmatmul.mubr.bf16.gmra.mxu0 %v429
        %v485 = vpop.f32.mrf.mxu0
        %v486 = vadd.f32 0.0, %v485
        %v487 = vpop.f32.mrf.mxu0
        %v488 = vpop.f32.mrf.mxu0
        %v489 = vadd.f32 0.0, %v488
        %v490 = vpop.f32.mrf.mxu0
        %491 = vmatprep.mubr.bf16.mxu0 0
        %492 = vmatmul.mubr.bf16.gmra.mxu0 %v430
        %v493 = vpop.f32.mrf.mxu0
        %v494 = vadd.f32 0.0, %v493
        %v495 = vpop.f32.mrf.mxu0
        %v496 = vpop.f32.mrf.mxu0
        %v497 = vadd.f32 0.0, %v496
        %v498 = vpop.f32.mrf.mxu0
        %499 = vdwg.mxu0
        %v500 = vmax.f32 %v394, %v470
        %v501 = vmax.f32 %v395, %v473
        %v502 = vmax.f32 %v396, %v478
        %v503 = vmax.f32 %v397, %v481
        %v504 = vmax.f32 %v398, %v486
        %v505 = vmax.f32 %v399, %v489
        %v506 = vmax.f32 %v400, %v494
        %v507 = vmax.f32 %v401, %v497
        %508 = vst [vmem:[#allocation2] sm:$0xff] %v500
        %509 = vst [vmem:[#allocation2 + $0x8] sm:$0xff] %v501
        %510 = vst [vmem:[#allocation2 + $0x10] sm:$0xff] %v502
        %511 = vst [vmem:[#allocation2 + $0x18] sm:$0xff] %v503
        %512 = vst [vmem:[#allocation2 + $0x20] sm:$0xff] %v504
        %513 = vst [vmem:[#allocation2 + $0x28] sm:$0xff] %v505
        %514 = vst [vmem:[#allocation2 + $0x30] sm:$0xff] %v506
        %515 = vst [vmem:[#allocation2 + $0x38] sm:$0xff] %v507
        %v516 = vld [vmem:[#allocation2] sm:$0xff]
        %v517 = vld [vmem:[#allocation2 + $0x8] sm:$0xff]
        %v518 = vld [vmem:[#allocation2 + $0x10] sm:$0xff]
        %v519 = vld [vmem:[#allocation2 + $0x18] sm:$0xff]
        %v520 = vld [vmem:[#allocation2 + $0x20] sm:$0xff]
        %v521 = vld [vmem:[#allocation2 + $0x28] sm:$0xff]
        %v522 = vld [vmem:[#allocation2 + $0x30] sm:$0xff]
        %v523 = vld [vmem:[#allocation2 + $0x38] sm:$0xff]
        %s524 = scalar_lea.vmem %s195, 64 [#allocation3]
        %v525 = vld [vmem:[%s524] sm:$0xf]
        %v526 = vld [vmem:[%s524 + $0x4] sm:$0xf]
        %v527 = vld [vmem:[%s524 + $0x8] sm:$0xf]
        %v528 = vld [vmem:[%s524 + $0xc] sm:$0xf]
        %v529 = vld [vmem:[%s524 + $0x10] sm:$0xf]
        %v530 = vld [vmem:[%s524 + $0x14] sm:$0xf]
        %v531 = vld [vmem:[%s524 + $0x18] sm:$0xf]
        %v532 = vld [vmem:[%s524 + $0x1c] sm:$0xf]
        %v541 = vunpack.c.l.b16 %v525
        %v542 = vunpack.c.l.b16 %v526
        %v543 = vunpack.c.l.b16 %v527
        %v544 = vunpack.c.l.b16 %v528
        %v545 = vunpack.c.l.b16 %v529
        %v546 = vunpack.c.l.b16 %v530
        %v547 = vunpack.c.l.b16 %v531
        %v548 = vunpack.c.l.b16 %v532
        %v549 = vpack.c.b16 %v542, %v541
        %v550 = vpack.c.b16 %v544, %v543
        %v551 = vpack.c.b16 %v546, %v545
        %v552 = vpack.c.b16 %v548, %v547
        %557 = vmatprep.subr.bf16.mxu0 0
        %558 = vmatpush1.bf16.msra.mxu0 %v312
        %559 = vmatprep.subr.bf16.mxu0 0
        %560 = vmatpush1.bf16.msra.mxu0 %v311
        %561 = vmatprep.subr.bf16.mxu0 0
        %562 = vmatpush1.bf16.msra.mxu0 %v310
        %563 = vmatprep.subr.bf16.mxu0 0
        %564 = vmatpush1.bf16.msra.mxu0 %v309
        %565 = vmatprep.subr.bf16.mxu0 0
        %566 = vmatpush1.bf16.msra.mxu0 %v308
        %567 = vmatprep.subr.bf16.mxu0 0
        %568 = vmatpush1.bf16.msra.mxu0 %v307
        %569 = vmatprep.subr.bf16.mxu0 0
        %570 = vmatpush1.bf16.msra.mxu0 %v306
        %571 = vmatprep.subr.bf16.mxu0 0
        %572 = vmatpush1.bf16.msra.mxu0 %v305
        %573 = vmatprep.subr.bf16.mxu0 0
        %574 = vmatpush2.bf16.msra.mxu0 0
        %575 = vmatprep.subr.bf16.mxu0 0
        %576 = vmatpush2.bf16.msra.mxu0 0
        %577 = vmatprep.subr.bf16.mxu0 0
        %578 = vmatpush2.bf16.msra.mxu0 0
        %579 = vmatprep.subr.bf16.mxu0 0
        %580 = vmatpush2.bf16.msra.mxu0 0
        %581 = vmatprep.subr.bf16.mxu0 0
        %582 = vmatpush2.bf16.msra.mxu0 0
        %583 = vmatprep.subr.bf16.mxu0 0
        %584 = vmatpush2.bf16.msra.mxu0 0
        %585 = vmatprep.subr.bf16.mxu0 0
        %586 = vmatpush2.bf16.msra.mxu0 0
        %587 = vmatprep.subr.bf16.mxu0 0
        %588 = vmatpush2.bf16.msra.mxu0 0
        %589 = vmatprep.mubr.bf16.mxu0 0
        %590 = vmatmul.mubr.bf16.gmra.mxu0 %v549
        %v591 = vpop.f32.mrf.mxu0
        %v592 = vadd.f32 0.0, %v591
        %v593 = vpop.f32.mrf.mxu0
        %v594 = vpop.f32.mrf.mxu0
        %v595 = vadd.f32 0.0, %v594
        %v596 = vpop.f32.mrf.mxu0
        %597 = vmatprep.mubr.bf16.mxu0 0
        %598 = vmatmul.mubr.bf16.gmra.mxu0 %v550
        %v599 = vpop.f32.mrf.mxu0
        %v600 = vadd.f32 0.0, %v599
        %v601 = vpop.f32.mrf.mxu0
        %v602 = vpop.f32.mrf.mxu0
        %v603 = vadd.f32 0.0, %v602
        %v604 = vpop.f32.mrf.mxu0
        %605 = vmatprep.mubr.bf16.mxu0 0
        %606 = vmatmul.mubr.bf16.gmra.mxu0 %v551
        %v607 = vpop.f32.mrf.mxu0
        %v608 = vadd.f32 0.0, %v607
        %v609 = vpop.f32.mrf.mxu0
        %v610 = vpop.f32.mrf.mxu0
        %v611 = vadd.f32 0.0, %v610
        %v612 = vpop.f32.mrf.mxu0
        %613 = vmatprep.mubr.bf16.mxu0 0
        %614 = vmatmul.mubr.bf16.gmra.mxu0 %v552
        %v615 = vpop.f32.mrf.mxu0
        %v616 = vadd.f32 0.0, %v615
        %v617 = vpop.f32.mrf.mxu0
        %v618 = vpop.f32.mrf.mxu0
        %v619 = vadd.f32 0.0, %v618
        %v620 = vpop.f32.mrf.mxu0
        %621 = vdwg.mxu0
        %v622 = vmax.f32 %v516, %v592
        %v623 = vmax.f32 %v517, %v595
        %v624 = vmax.f32 %v518, %v600
        %v625 = vmax.f32 %v519, %v603
        %v626 = vmax.f32 %v520, %v608
        %v627 = vmax.f32 %v521, %v611
        %v628 = vmax.f32 %v522, %v616
        %v629 = vmax.f32 %v523, %v619
        %630 = vst [vmem:[#allocation2] sm:$0xff] %v622
        %631 = vst [vmem:[#allocation2 + $0x8] sm:$0xff] %v623
        %632 = vst [vmem:[#allocation2 + $0x10] sm:$0xff] %v624
        %633 = vst [vmem:[#allocation2 + $0x18] sm:$0xff] %v625
        %634 = vst [vmem:[#allocation2 + $0x20] sm:$0xff] %v626
        %635 = vst [vmem:[#allocation2 + $0x28] sm:$0xff] %v627
        %636 = vst [vmem:[#allocation2 + $0x30] sm:$0xff] %v628
        %637 = vst [vmem:[#allocation2 + $0x38] sm:$0xff] %v629
        %v638 = vld [vmem:[#allocation2] sm:$0xff]
        %v639 = vld [vmem:[#allocation2 + $0x8] sm:$0xff]
        %v640 = vld [vmem:[#allocation2 + $0x10] sm:$0xff]
        %v641 = vld [vmem:[#allocation2 + $0x18] sm:$0xff]
        %v642 = vld [vmem:[#allocation2 + $0x20] sm:$0xff]
        %v643 = vld [vmem:[#allocation2 + $0x28] sm:$0xff]
        %v644 = vld [vmem:[#allocation2 + $0x30] sm:$0xff]
        %v645 = vld [vmem:[#allocation2 + $0x38] sm:$0xff]
        %s646 = scalar_lea.vmem %s195, 96 [#allocation3]
        %v647 = vld [vmem:[%s646] sm:$0xf]
        %v648 = vld [vmem:[%s646 + $0x4] sm:$0xf]
        %v649 = vld [vmem:[%s646 + $0x8] sm:$0xf]
        %v650 = vld [vmem:[%s646 + $0xc] sm:$0xf]
        %v651 = vld [vmem:[%s646 + $0x10] sm:$0xf]
        %v652 = vld [vmem:[%s646 + $0x14] sm:$0xf]
        %v653 = vld [vmem:[%s646 + $0x18] sm:$0xf]
        %v654 = vld [vmem:[%s646 + $0x1c] sm:$0xf]
        %v663 = vunpack.c.l.b16 %v647
        %v664 = vunpack.c.l.b16 %v648
        %v665 = vunpack.c.l.b16 %v649
        %v666 = vunpack.c.l.b16 %v650
        %v667 = vunpack.c.l.b16 %v651
        %v668 = vunpack.c.l.b16 %v652
        %v669 = vunpack.c.l.b16 %v653
        %v670 = vunpack.c.l.b16 %v654
        %v671 = vpack.c.b16 %v664, %v663
        %v672 = vpack.c.b16 %v666, %v665
        %v673 = vpack.c.b16 %v668, %v667
        %v674 = vpack.c.b16 %v670, %v669
        %679 = vmatprep.subr.bf16.mxu0 0
        %680 = vmatpush1.bf16.msra.mxu0 %v312
        %681 = vmatprep.subr.bf16.mxu0 0
        %682 = vmatpush1.bf16.msra.mxu0 %v311
        %683 = vmatprep.subr.bf16.mxu0 0
        %684 = vmatpush1.bf16.msra.mxu0 %v310
        %685 = vmatprep.subr.bf16.mxu0 0
        %686 = vmatpush1.bf16.msra.mxu0 %v309
        %687 = vmatprep.subr.bf16.mxu0 0
        %688 = vmatpush1.bf16.msra.mxu0 %v308
        %689 = vmatprep.subr.bf16.mxu0 0
        %690 = vmatpush1.bf16.msra.mxu0 %v307
        %691 = vmatprep.subr.bf16.mxu0 0
        %692 = vmatpush1.bf16.msra.mxu0 %v306
        %693 = vmatprep.subr.bf16.mxu0 0
        %694 = vmatpush1.bf16.msra.mxu0 %v305
        %695 = vmatprep.subr.bf16.mxu0 0
        %696 = vmatpush2.bf16.msra.mxu0 0
        %697 = vmatprep.subr.bf16.mxu0 0
        %698 = vmatpush2.bf16.msra.mxu0 0
        %699 = vmatprep.subr.bf16.mxu0 0
        %700 = vmatpush2.bf16.msra.mxu0 0
        %701 = vmatprep.subr.bf16.mxu0 0
        %702 = vmatpush2.bf16.msra.mxu0 0
        %703 = vmatprep.subr.bf16.mxu0 0
        %704 = vmatpush2.bf16.msra.mxu0 0
        %705 = vmatprep.subr.bf16.mxu0 0
        %706 = vmatpush2.bf16.msra.mxu0 0
        %707 = vmatprep.subr.bf16.mxu0 0
        %708 = vmatpush2.bf16.msra.mxu0 0
        %709 = vmatprep.subr.bf16.mxu0 0
        %710 = vmatpush2.bf16.msra.mxu0 0
        %711 = vmatprep.mubr.bf16.mxu0 0
        %712 = vmatmul.mubr.bf16.gmra.mxu0 %v671
        %v713 = vpop.f32.mrf.mxu0
        %v714 = vadd.f32 0.0, %v713
        %v715 = vpop.f32.mrf.mxu0
        %v716 = vpop.f32.mrf.mxu0
        %v717 = vadd.f32 0.0, %v716
        %v718 = vpop.f32.mrf.mxu0
        %719 = vmatprep.mubr.bf16.mxu0 0
        %720 = vmatmul.mubr.bf16.gmra.mxu0 %v672
        %v721 = vpop.f32.mrf.mxu0
        %v722 = vadd.f32 0.0, %v721
        %v723 = vpop.f32.mrf.mxu0
        %v724 = vpop.f32.mrf.mxu0
        %v725 = vadd.f32 0.0, %v724
        %v726 = vpop.f32.mrf.mxu0
        %727 = vmatprep.mubr.bf16.mxu0 0
        %728 = vmatmul.mubr.bf16.gmra.mxu0 %v673
        %v729 = vpop.f32.mrf.mxu0
        %v730 = vadd.f32 0.0, %v729
        %v731 = vpop.f32.mrf.mxu0
        %v732 = vpop.f32.mrf.mxu0
        %v733 = vadd.f32 0.0, %v732
        %v734 = vpop.f32.mrf.mxu0
        %735 = vmatprep.mubr.bf16.mxu0 0
        %736 = vmatmul.mubr.bf16.gmra.mxu0 %v674
        %v737 = vpop.f32.mrf.mxu0
        %v738 = vadd.f32 0.0, %v737
        %v739 = vpop.f32.mrf.mxu0
        %v740 = vpop.f32.mrf.mxu0
        %v741 = vadd.f32 0.0, %v740
        %v742 = vpop.f32.mrf.mxu0
        %743 = vdwg.mxu0
        %v744 = vmax.f32 %v638, %v714
        %v745 = vmax.f32 %v639, %v717
        %v746 = vmax.f32 %v640, %v722
        %v747 = vmax.f32 %v641, %v725
        %v748 = vmax.f32 %v642, %v730
        %v749 = vmax.f32 %v643, %v733
        %v750 = vmax.f32 %v644, %v738
        %v751 = vmax.f32 %v645, %v741
        %752 = vst [vmem:[#allocation2] sm:$0xff] %v744
        %753 = vst [vmem:[#allocation2 + $0x8] sm:$0xff] %v745
        %754 = vst [vmem:[#allocation2 + $0x10] sm:$0xff] %v746
        %755 = vst [vmem:[#allocation2 + $0x18] sm:$0xff] %v747
        %756 = vst [vmem:[#allocation2 + $0x20] sm:$0xff] %v748
        %757 = vst [vmem:[#allocation2 + $0x28] sm:$0xff] %v749
        %758 = vst [vmem:[#allocation2 + $0x30] sm:$0xff] %v750
        %759 = vst [vmem:[#allocation2 + $0x38] sm:$0xff] %v751
        %v760 = vld [vmem:[#allocation2] sm:$0xff]
        %v761 = vld [vmem:[#allocation2 + $0x8] sm:$0xff]
        %v762 = vld [vmem:[#allocation2 + $0x10] sm:$0xff]
        %v763 = vld [vmem:[#allocation2 + $0x18] sm:$0xff]
        %v764 = vld [vmem:[#allocation2 + $0x20] sm:$0xff]
        %v765 = vld [vmem:[#allocation2 + $0x28] sm:$0xff]
        %v766 = vld [vmem:[#allocation2 + $0x30] sm:$0xff]
        %v767 = vld [vmem:[#allocation2 + $0x38] sm:$0xff]
        %v768 = vld [vmem:[%s2] sm:$0x1]
        %v770 = vlaneseq
        %v771 = vshrl.u32 %v770, 7
        %v772 = vsub.s32 0, %v771
        %v773 = vrot.slane %v768, %v772
        %v775 = vadd.f32 %v760, %v773
        %v776 = vadd.f32 %v761, %v773
        %v777 = vadd.f32 %v762, %v773
        %v778 = vadd.f32 %v763, %v773
        %v779 = vadd.f32 %v764, %v773
        %v780 = vadd.f32 %v765, %v773
        %v781 = vadd.f32 %v766, %v773
        %v782 = vadd.f32 %v767, %v773
        %v783 = vmax.f32 %v775, 0.0
        %v784 = vmax.f32 %v776, 0.0
        %v785 = vmax.f32 %v777, 0.0
        %v786 = vmax.f32 %v778, 0.0
        %v787 = vmax.f32 %v779, 0.0
        %v788 = vmax.f32 %v780, 0.0
        %v789 = vmax.f32 %v781, 0.0
        %v790 = vmax.f32 %v782, 0.0
        %v791 = vpack.c.bf16 %v784, %v783
        %v792 = vpack.c.bf16 %v786, %v785
        %v793 = vpack.c.bf16 %v788, %v787
        %v794 = vpack.c.bf16 %v790, %v789
        %v799 = vunpack.c.l.b16 %v791
        %v800 = vunpack.c.h.b16 %v791
        %v801 = vunpack.c.l.b16 %v792
        %v802 = vunpack.c.h.b16 %v792
        %v803 = vunpack.c.l.b16 %v793
        %v804 = vunpack.c.h.b16 %v793
        %v805 = vunpack.c.l.b16 %v794
        %v806 = vunpack.c.h.b16 %v794
        %v807 = vpack.c.b16 %v799, %v799
        %v808 = vpack.c.b16 %v800, %v800
        %v809 = vpack.c.b16 %v801, %v801
        %v810 = vpack.c.b16 %v802, %v802
        %v811 = vpack.c.b16 %v803, %v803
        %v812 = vpack.c.b16 %v804, %v804
        %v813 = vpack.c.b16 %v805, %v805
        %v814 = vpack.c.b16 %v806, %v806
        %823 = vst [vmem:[%s221] sm:$0xf] %v807
        %824 = vst [vmem:[%s221 + $0x4] sm:$0xf] %v808
        %825 = vst [vmem:[%s221 + $0x8] sm:$0xf] %v809
        %826 = vst [vmem:[%s221 + $0xc] sm:$0xf] %v810
        %827 = vst [vmem:[%s221 + $0x10] sm:$0xf] %v811
        %828 = vst [vmem:[%s221 + $0x14] sm:$0xf] %v812
        %829 = vst [vmem:[%s221 + $0x18] sm:$0xf] %v813
        %830 = vst [vmem:[%s221 + $0x1c] sm:$0xf] %v814
        %s831 = sand.u32 %s113, 1
        %s832 = scalar_lea.sflag [#allocation5], %s831
        %s833 = sand.u32 %s113, 1
        %s834 = smul.addr %s833, 32
        %s835 = scalar_lea.vmem [#allocation8], %s834
        // Predicated region
        $region41: #{tpu_custom_call.1} parent=31 // pred_check
          %p836 = pneg %p123
        $region42: #{tpu_custom_call.1} parent=31 // pred_check_branch
          %838 = sbr.rel (%p836) target = $region44
        $region43: #{tpu_custom_call.1} parent=31 // pred_region
          %s839 = smul.u32 8, %s26
          %s841 = ssub.s32 512, 512
          %842 = vsyncadd %s832, %s841
          %s843 = smul.addr %s25, 8
          %s844 = sadd.s32 %s839, %s843
          %s845 = smul.addr %s844, 64
          %s846 = scalar_lea.hbm %s3, %s845
          %s847 = sshll.u32 %s835, 4
          %s848 = int_to_ptr.vmem [resolvable:$true] %s847
          %853 = dma.vmem_to_hbm [thread:$0]  %s848, 512, %s846, %s832, 64, 64, 4
        $region44: #{tpu_custom_call.1} parent=31 // pred_fallthru
          _
      $region32: #{tpu_custom_call.1} parent=5 // pred_fallthru
        _
      %p854 = scmp.le.s32.totalorder 2, %s16
      // Predicated region
      $region45: #{tpu_custom_call.1} parent=5 // pred_check
        %p855 = pneg %p854
      $region46: #{tpu_custom_call.1} parent=5 // pred_check_branch
        %857 = sbr.rel (%p855) target = $region48
      $region47: #{tpu_custom_call.1} parent=5 // pred_region
        %s858 = ssub.s32 %s16, 2
        // Predicated region
        $region49: #{tpu_custom_call.1} parent=47 // pred_check
          %p859 = pneg %p129
        $region50: #{tpu_custom_call.1} parent=47 // pred_check_branch
          %861 = sbr.rel (%p859) target = $region52
        $region51: #{tpu_custom_call.1} parent=47 // pred_region
          %s862 = sand.u32 %s114, 1
          %s863 = scalar_lea.sflag [#allocation5], %s862
          %s864 = sand.u32 %s114, 1
          %s865 = smul.addr %s864, 32
          %s866 = scalar_lea.vmem [#allocation8], %s865
          %867 = dma.done %s863, 512
        $region52: #{tpu_custom_call.1} parent=47 // pred_fallthru
          _
      $region48: #{tpu_custom_call.1} parent=5 // pred_fallthru
        _
    $region6: #{tpu_custom_call.1} parent=1 // loop_footer
      %s20 = sadd.s32 1, %s16
    $region7: #{tpu_custom_call.1} parent=1 // loop_footer_branch
      %15 = sbr.rel target = $region3
    $region8: #{tpu_custom_call.1} parent=1 // loop_exit
      _
    %868 = vsyncpa [#allocation4], 1
    %s869 = scalar_lea.sflag [#allocation4], 1
    %870 = vsyncpa %s869, 1
    %871 = vsyncpa [#allocation7], 1
    %872 = vsyncpa [#allocation5], 1
    %s873 = scalar_lea.sflag [#allocation5], 1
    %874 = vsyncpa %s873, 1

</llo_original>
